<compile_context>
chip_gen: v6e
topology: v6e:2x2x1
jax: 0.10.0
libtpu: 0.0.40
codegen_flags: <defaults>
</compile_context>

<pallas_src>
import jax
import jax.numpy as jnp
from jax.experimental import pallas as pl
from jax.experimental.pallas import tpu as pltpu


def _round_up(x, m):
    return (x + m - 1) // m * m


def _default_vmem_limit_bytes():
    # Use ~75% of physical VMEM as the scoped limit; fall back to the default.
    try:
        cap = pltpu.get_tpu_info().vmem_capacity_bytes
        return int(cap * 3 // 4)
    except Exception:
        return None


def generator_kernel(x_ref, w_ref, b_ref, o_ref, m_ref, l_ref):
    # x_ref: (tm, D) bf16       -- resident across the vocab axis
    # w_ref: (D, tv) bf16       -- streamed vocab tile of the weight
    # b_ref: (1, tv) f32        -- streamed vocab tile of the bias
    # o_ref: (tm, n_v, tv) f32  -- resident output row-block (lane-dense tiles)
    # m_ref, l_ref: (tm, 1) f32 -- running max / running sum-exp
    j = pl.program_id(1)

    @pl.when(j == 0)
    def _init():
        m_ref[...] = jnp.full(m_ref.shape, -jnp.inf, dtype=m_ref.dtype)
        l_ref[...] = jnp.zeros(l_ref.shape, dtype=l_ref.dtype)

    # MXU matmul: bf16 x bf16 with f32 accumulation, bias added in f32.
    logits = jnp.dot(x_ref[...], w_ref[...],
                     preferred_element_type=jnp.float32) + b_ref[...]

    # Stage raw f32 logits into the resident output row-block at vocab tile j.
    o_ref[:, pl.ds(j, 1), :] = logits[:, None, :].astype(o_ref.dtype)

    # Online running max / sum-exp along the vocab axis.
    m_prev = m_ref[...]
    m_new = jnp.maximum(m_prev, jnp.max(logits, axis=-1, keepdims=True))
    l_ref[...] = (l_ref[...] * jnp.exp(m_prev - m_new)
                  + jnp.sum(jnp.exp(logits - m_new), axis=-1, keepdims=True))
    m_ref[...] = m_new

    @pl.when(j == pl.num_programs(1) - 1)
    def _finalize():
        lse = m_ref[...] + jnp.log(l_ref[...])            # (tm, 1)
        o_ref[...] = (o_ref[...].astype(jnp.float32)
                      - lse[:, :, None]).astype(o_ref.dtype)


def generator_forward(x, w, b, *, tm=256, tv=512,
                      compute_dtype=jnp.bfloat16,
                      out_dtype=jnp.float32,
                      vmem_limit_bytes=None):
    """x: [B, S, D]; w: [D, V]; b: [V]. Returns [B, S, V] log-probabilities."""
    B, S, D = x.shape
    V = w.shape[1]
    M = B * S

    # Row tile: as large as requested, but never larger than the row count
    # (rounded to a bf16-friendly multiple of 16). Rows are padded, not asserted.
    tm = max(16, _round_up(min(int(tm), _round_up(M, 16)), 16))
    M_pad = _round_up(M, tm)

    # Vocab (lane) tile: multiple of 128, never larger than the padded vocab.
    tv = max(128, _round_up(min(int(tv), _round_up(V, 128)), 128))
    V_pad = _round_up(V, tv)
    n_v = V_pad // tv

    if vmem_limit_bytes is None:
        vmem_limit_bytes = _default_vmem_limit_bytes()

    x2 = x.reshape(M, D).astype(compute_dtype)
    if M_pad != M:
        x2 = jnp.pad(x2, ((0, M_pad - M), (0, 0)))
    w2 = w.astype(compute_dtype)
    b2 = b.astype(jnp.float32)
    if V_pad != V:
        w2 = jnp.pad(w2, ((0, 0), (0, V_pad - V)))
        # Huge negative bias on padded vocab columns: they never affect the lse.
        b2 = jnp.pad(b2, ((0, V_pad - V),), constant_values=-1e30)
    b2 = b2.reshape(1, V_pad)

    grid = (M_pad // tm, n_v)

    in_itemsize = jnp.dtype(compute_dtype).itemsize
    out_itemsize = jnp.dtype(out_dtype).itemsize
    cost = pl.CostEstimate(
        flops=int(2 * M_pad * D * V_pad),
        transcendentals=int(M_pad * V_pad),
        bytes_accessed=int(M_pad * D * in_itemsize
                           + grid[0] * D * V_pad * in_itemsize
                           + grid[0] * V_pad * 4
                           + M_pad * V_pad * out_itemsize),
    )

    out = pl.pallas_call(
        generator_kernel,
        out_shape=jax.ShapeDtypeStruct((M_pad, n_v, tv), out_dtype),
        grid_spec=pltpu.PrefetchScalarGridSpec(
            num_scalar_prefetch=0,
            grid=grid,
            in_specs=[
                pl.BlockSpec((tm, D), lambda i, j: (i, 0)),   # activations (resident over vocab)
                pl.BlockSpec((D, tv), lambda i, j: (0, j)),   # streamed weight tile
                pl.BlockSpec((1, tv), lambda i, j: (0, j)),   # streamed bias tile
            ],
            out_specs=pl.BlockSpec((tm, n_v, tv), lambda i, j: (i, 0, 0)),
            scratch_shapes=[
                pltpu.VMEM((tm, 1), jnp.float32),   # running max
                pltpu.VMEM((tm, 1), jnp.float32),   # running sum-exp
            ],
        ),
        compiler_params=pltpu.CompilerParams(
            dimension_semantics=("parallel", "arbitrary"),
            vmem_limit_bytes=vmem_limit_bytes,
        ),
        cost_estimate=cost,
    )(x2, w2, b2)

    # (M_pad, n_v, tv) is row-major contiguous -> free reshape to (M_pad, V_pad).
    out = out.reshape(M_pad, V_pad)[:M, :V]
    return out.reshape(B, S, V)


if __name__ == "__main__":
    # Small shapes consistent with the module: batch=2, seq=8, d_model=32, vocab=128
    B, S, D, V = 2, 8, 32, 128

    key = jax.random.PRNGKey(0)
    kx, kw, kb = jax.random.split(key, 3)
    x = jax.random.normal(kx, (B, S, D), dtype=jnp.float32)
    # Linear params (torch weight is [V, D]; we store the transposed [D, V]).
    w = (jax.random.normal(kw, (D, V), dtype=jnp.float32) / jnp.sqrt(D)).astype(jnp.float32)
    b = (jax.random.normal(kb, (V,), dtype=jnp.float32) * 0.01).astype(jnp.float32)

    out = generator_forward(x, w, b)
    jax.block_until_ready(out)

    # Reference in plain JAX with the same bf16 matmul inputs / f32 accumulation.
    xb = x.astype(jnp.bfloat16)
    wb = w.astype(jnp.bfloat16)
    logits_ref = jnp.einsum("bsd,dv->bsv", xb, wb,
                            preferred_element_type=jnp.float32) + b
    ref = jax.nn.log_softmax(logits_ref, axis=-1)

    assert out.shape == (B, S, V)
    assert out.dtype == jnp.float32
    err = float(jnp.max(jnp.abs(out - ref)))
    assert jnp.allclose(out, ref, atol=1e-2, rtol=1e-2), f"mismatch vs reference, max err {err}"

    print("KERNEL_OK")
</pallas_src>

<mosaic_0001>
module attributes {stable_mosaic.version = 11 : i64} {
  func.func @generator_kernel(%arg0: i32, %arg1: i32, %arg2: memref<16x32xbf16, #tpu.memory_space<vmem>>, %arg3: memref<32x128xbf16, #tpu.memory_space<vmem>>, %arg4: memref<1x128xf32, #tpu.memory_space<vmem>>, %arg5: memref<16x1x128xf32, #tpu.memory_space<vmem>>, %arg6: memref<16x1xf32, #tpu.memory_space<vmem>>, %arg7: memref<16x1xf32, #tpu.memory_space<vmem>>) attributes {dimension_semantics = [#tpu.dimension_semantics<parallel>, #tpu.dimension_semantics<arbitrary>], iteration_bounds = array<i64: 1, 1>, scalar_prefetch = 0 : i64, scratch_operands = 2 : i64, tpu.core_type = #tpu.core_type<tc>, window_params = [{transform_indices = @transform_0, window_bounds = array<i64: 16, 32>}, {transform_indices = @transform_1, window_bounds = array<i64: 32, 128>}, {transform_indices = @transform_2, window_bounds = array<i64: 1, 128>}, {transform_indices = @transform_3, window_bounds = array<i64: 16, 1, 128>}]} {
    %c0_i32 = arith.constant 0 : i32
    %0 = arith.cmpi eq, %arg1, %c0_i32 : i32
    %1 = arith.extui %0 : i1 to i32
    %c0_i32_0 = arith.constant 0 : i32
    %2 = arith.cmpi ne, %1, %c0_i32_0 : i32
    scf.if %2 {
      %cst_20 = arith.constant 0xFF800000 : f32
      %31 = vector.broadcast %cst_20 : f32 to vector<16x1xf32>
      %c0_21 = arith.constant 0 : index
      %c0_22 = arith.constant 0 : index
      %32 = vector.load %arg6[%c0_21, %c0_22] : memref<16x1xf32, #tpu.memory_space<vmem>>, vector<16x1xf32>
      tpu.vector_store %arg6[%c0_21, %c0_22], %31 {strides = array<i32>} : memref<16x1xf32, #tpu.memory_space<vmem>>, vector<16x1xf32>,
      %cst_23 = arith.constant 0.000000e+00 : f32
      %33 = vector.broadcast %cst_23 : f32 to vector<16x1xf32>
      %c0_24 = arith.constant 0 : index
      %c0_25 = arith.constant 0 : index
      %34 = vector.load %arg7[%c0_24, %c0_25] : memref<16x1xf32, #tpu.memory_space<vmem>>, vector<16x1xf32>
      tpu.vector_store %arg7[%c0_24, %c0_25], %33 {strides = array<i32>} : memref<16x1xf32, #tpu.memory_space<vmem>>, vector<16x1xf32>,
    } else {
    }
    %c0 = arith.constant 0 : index
    %c0_1 = arith.constant 0 : index
    %3 = vector.load %arg2[%c0, %c0_1] : memref<16x32xbf16, #tpu.memory_space<vmem>>, vector<16x32xbf16>
    %c0_2 = arith.constant 0 : index
    %c0_3 = arith.constant 0 : index
    %4 = vector.load %arg3[%c0_2, %c0_3] : memref<32x128xbf16, #tpu.memory_space<vmem>>, vector<32x128xbf16>
    %cst = arith.constant dense<0.000000e+00> : vector<16x128xf32>
    %5 = tpu.matmul %3, %4, %cst {dimension_numbers = #tpu.dot_dimension_numbers<[1], [0], [0], [1], [0, 0, 1, 1], [], []>} : vector<16x32xbf16>, vector<32x128xbf16>, vector<16x128xf32> -> vector<16x128xf32>
    %c0_4 = arith.constant 0 : index
    %c0_5 = arith.constant 0 : index
    %6 = vector.load %arg4[%c0_4, %c0_5] : memref<1x128xf32, #tpu.memory_space<vmem>>, vector<1x128xf32>
    %7 = vector.broadcast %6 : vector<1x128xf32> to vector<16x128xf32>
    %8 = arith.addf %5, %7 : vector<16x128xf32>
    %9 = vector.shape_cast %8 : vector<16x128xf32> to vector<16x1x128xf32>
    %c0_6 = arith.constant 0 : index
    %10 = arith.index_cast %arg1 : i32 to index
    %c0_7 = arith.constant 0 : index
    %11 = vector.load %arg5[%c0_6, %10, %c0_7] : memref<16x1x128xf32, #tpu.memory_space<vmem>>, vector<16x1x128xf32>
    tpu.vector_store %arg5[%c0_6, %10, %c0_7], %9 {strides = array<i32>} : memref<16x1x128xf32, #tpu.memory_space<vmem>>, vector<16x1x128xf32>,
    %c0_8 = arith.constant 0 : index
    %c0_9 = arith.constant 0 : index
    %12 = vector.load %arg6[%c0_8, %c0_9] : memref<16x1xf32, #tpu.memory_space<vmem>>, vector<16x1xf32>
    %cst_10 = arith.constant dense<0xFF800000> : vector<16xf32>
    %13 = vector.multi_reduction <maximumf>, %8, %cst_10 [1] : vector<16x128xf32> to vector<16xf32>
    %14 = vector.shape_cast %13 : vector<16xf32> to vector<16x1xf32>
    %15 = arith.maximumf %12, %14 : vector<16x1xf32>
    %c0_11 = arith.constant 0 : index
    %c0_12 = arith.constant 0 : index
    %16 = vector.load %arg7[%c0_11, %c0_12] : memref<16x1xf32, #tpu.memory_space<vmem>>, vector<16x1xf32>
    %17 = arith.subf %12, %15 : vector<16x1xf32>
    %18 = math.exp %17 : vector<16x1xf32>
    %19 = arith.mulf %16, %18 : vector<16x1xf32>
    %20 = vector.broadcast %15 : vector<16x1xf32> to vector<16x128xf32>
    %21 = arith.subf %8, %20 : vector<16x128xf32>
    %22 = math.exp %21 : vector<16x128xf32>
    %cst_13 = arith.constant dense<0.000000e+00> : vector<16xf32>
    %23 = vector.multi_reduction <add>, %22, %cst_13 [1] : vector<16x128xf32> to vector<16xf32>
    %24 = vector.shape_cast %23 : vector<16xf32> to vector<16x1xf32>
    %25 = arith.addf %19, %24 : vector<16x1xf32>
    %c0_14 = arith.constant 0 : index
    %c0_15 = arith.constant 0 : index
    %26 = vector.load %arg7[%c0_14, %c0_15] : memref<16x1xf32, #tpu.memory_space<vmem>>, vector<16x1xf32>
    tpu.vector_store %arg7[%c0_14, %c0_15], %25 {strides = array<i32>} : memref<16x1xf32, #tpu.memory_space<vmem>>, vector<16x1xf32>,
    %c0_16 = arith.constant 0 : index
    %c0_17 = arith.constant 0 : index
    %27 = vector.load %arg6[%c0_16, %c0_17] : memref<16x1xf32, #tpu.memory_space<vmem>>, vector<16x1xf32>
    tpu.vector_store %arg6[%c0_16, %c0_17], %15 {strides = array<i32>} : memref<16x1xf32, #tpu.memory_space<vmem>>, vector<16x1xf32>,
    %c0_i32_18 = arith.constant 0 : i32
    %28 = arith.cmpi eq, %arg1, %c0_i32_18 : i32
    %29 = arith.extui %28 : i1 to i32
    %c0_i32_19 = arith.constant 0 : i32
    %30 = arith.cmpi ne, %29, %c0_i32_19 : i32
    scf.if %30 {
      %c0_20 = arith.constant 0 : index
      %c0_21 = arith.constant 0 : index
      %31 = vector.load %arg6[%c0_20, %c0_21] : memref<16x1xf32, #tpu.memory_space<vmem>>, vector<16x1xf32>
      %c0_22 = arith.constant 0 : index
      %c0_23 = arith.constant 0 : index
      %32 = vector.load %arg7[%c0_22, %c0_23] : memref<16x1xf32, #tpu.memory_space<vmem>>, vector<16x1xf32>
      %33 = math.log %32 : vector<16x1xf32>
      %34 = arith.addf %31, %33 : vector<16x1xf32>
      %c0_24 = arith.constant 0 : index
      %c0_25 = arith.constant 0 : index
      %c0_26 = arith.constant 0 : index
      %35 = vector.load %arg5[%c0_24, %c0_25, %c0_26] : memref<16x1x128xf32, #tpu.memory_space<vmem>>, vector<16x1x128xf32>
      %36 = vector.shape_cast %34 : vector<16x1xf32> to vector<16x1x1xf32>
      %37 = vector.broadcast %36 : vector<16x1x1xf32> to vector<16x1x128xf32>
      %38 = arith.subf %35, %37 : vector<16x1x128xf32>
      %c0_27 = arith.constant 0 : index
      %c0_28 = arith.constant 0 : index
      %c0_29 = arith.constant 0 : index
      %39 = vector.load %arg5[%c0_27, %c0_28, %c0_29] : memref<16x1x128xf32, #tpu.memory_space<vmem>>, vector<16x1x128xf32>
      tpu.vector_store %arg5[%c0_27, %c0_28, %c0_29], %38 {strides = array<i32>} : memref<16x1x128xf32, #tpu.memory_space<vmem>>, vector<16x1x128xf32>,
    } else {
    }
    return
  }
  func.func @transform_0(%arg0: i32, %arg1: i32) -> (i32, i32) {
    %c0_i32 = arith.constant 0 : i32
    %c0_i32_0 = arith.constant 0 : i32
    return %arg0, %c0_i32 : i32, i32
  }
  func.func @transform_1(%arg0: i32, %arg1: i32) -> (i32, i32) {
    %c0_i32 = arith.constant 0 : i32
    %c0_i32_0 = arith.constant 0 : i32
    return %c0_i32, %arg1 : i32, i32
  }
  func.func @transform_2(%arg0: i32, %arg1: i32) -> (i32, i32) {
    %c0_i32 = arith.constant 0 : i32
    %c0_i32_0 = arith.constant 0 : i32
    return %c0_i32, %arg1 : i32, i32
  }
  func.func @transform_3(%arg0: i32, %arg1: i32) -> (i32, i32, i32) {
    %c0_i32 = arith.constant 0 : i32
    %c0_i32_0 = arith.constant 0 : i32
    %c0_i32_1 = arith.constant 0 : i32
    return %arg0, %c0_i32, %c0_i32_0 : i32, i32, i32
  }
}

</mosaic_0001>

<llo_original>
// kernel: tpu_custom_call.1
$region0: #{tpu_custom_call.1}
  #allocation0 [shape = 'u32[]', space=smem, size = 0x4, offset = 0x4, fixed_abs, tag = 'smem constant byte address 0x4 - core index']
  #allocation1 [shape = 'u32[144,128]{1,0:T(1,128)}', space=vmem, size = 0x12000, scoped, tag = 'internal scratch']
  #allocation2 [shape = 'f32[16,1]{1,0:T(8,128)}', space=vmem, size = 0x2000, scoped, tag = 'scratch operand']
  #allocation3 [shape = 'f32[16,1]{1,0:T(8,128)}', space=vmem, size = 0x2000, scoped, tag = 'scratch operand']
  %s0 = inlined_call_operand.hbm [shape: bf16[16,32], index: 0, kind: input, shape index: {}]
  %s1 = inlined_call_operand.hbm [shape: bf16[32,128], index: 1, kind: input, shape index: {}]
  %s2 = inlined_call_operand.vmem [shape: f32[1,128], index: 2, kind: input, shape index: {}]
  %s3 = inlined_call_operand.hbm [shape: f32[16,1,128], index: 3, kind: output, shape index: {}]
  %s4 = sld [smem:[#allocation0]]
  $region38: #{tpu_custom_call.1} parent=0
    _
  %s6 = ssub.s32 1, %s4
  %s7 = scalar_select 0, %s6, %s4
  $region1: #{tpu_custom_call.1} parent=0
    #allocation4 [shape = 'u8[4096]{0}', space=vmem, size = 0x1000, scoped, tag = 'input window, operand 0, single buffered']
    #allocation5 [shape = 's32[1]{0}', space=sflag, size = 0x4, scoped, tag = 'scoped memory for tpu_custom_call.1']
    #allocation6 [shape = 's32[1]{0}', space=sflag, size = 0x4, scoped, tag = 'scoped memory for tpu_custom_call.1']
    #allocation7 [shape = 'u8[8192]{0}', space=vmem, size = 0x2000, scoped, tag = 'input window, operand 1, single buffered']
    #allocation8 [shape = 's32[1]{0}', space=sflag, size = 0x4, scoped, tag = 'scoped memory for tpu_custom_call.1']
    #allocation9 [shape = 'u8[8192]{0}', space=vmem, size = 0x2000, scoped, tag = 'output window, operand 0, single buffered']
    %8 = vsyncpa [#allocation5], 0
    %9 = vsyncpa [#allocation8], 0
    %10 = vsyncpa [#allocation6], 0
    // Predicated region
    $region2: #{tpu_custom_call.1} parent=1 // pred_check
      _
    $region3: #{tpu_custom_call.1} parent=1 // pred_check_branch
      %12 = sbr.rel (0) target = $region5
    $region4: #{tpu_custom_call.1} parent=1 // pred_region
      %s14 = ssub.s32 128, 128
      %15 = vsyncadd [#allocation5], %s14
      %s16 = sshll.u32 [#allocation4], 4
      %s17 = int_to_ptr.vmem [resolvable:$true] %s16
      %22 = dma.hbm_to_vmem [thread:$0]  %s0, 128, %s17, [#allocation5], 64, 64, 4
    $region5: #{tpu_custom_call.1} parent=1 // pred_fallthru
      _
    // Predicated region
    $region6: #{tpu_custom_call.1} parent=1 // pred_check
      _
    $region7: #{tpu_custom_call.1} parent=1 // pred_check_branch
      %24 = sbr.rel (0) target = $region9
    $region8: #{tpu_custom_call.1} parent=1 // pred_region
      %s26 = ssub.s32 256, 256
      %27 = vsyncadd [#allocation8], %s26
      %s28 = sshll.u32 [#allocation7], 4
      %s29 = int_to_ptr.vmem [resolvable:$true] %s28
      %34 = dma.hbm_to_vmem [thread:$0]  %s1, 256, %s29, [#allocation8], 64, 64, 4
    $region9: #{tpu_custom_call.1} parent=1 // pred_fallthru
      _
    // Predicated region
    $region10: #{tpu_custom_call.1} parent=1 // pred_check
      _
    $region11: #{tpu_custom_call.1} parent=1 // pred_check_branch
      %36 = sbr.rel (0) target = $region13
    $region12: #{tpu_custom_call.1} parent=1 // pred_region
      _
    $region13: #{tpu_custom_call.1} parent=1 // pred_fallthru
      _
    // Predicated region
    $region14: #{tpu_custom_call.1} parent=1 // pred_check
      _
    $region15: #{tpu_custom_call.1} parent=1 // pred_check_branch
      %38 = sbr.rel (0) target = $region17
    $region16: #{tpu_custom_call.1} parent=1 // pred_region
      %39 = dma.done [#allocation5], 128
    $region17: #{tpu_custom_call.1} parent=1 // pred_fallthru
      _
    // Predicated region
    $region18: #{tpu_custom_call.1} parent=1 // pred_check
      _
    $region19: #{tpu_custom_call.1} parent=1 // pred_check_branch
      %41 = sbr.rel (0) target = $region21
    $region20: #{tpu_custom_call.1} parent=1 // pred_region
      %42 = dma.done [#allocation8], 256
    $region21: #{tpu_custom_call.1} parent=1 // pred_fallthru
      _
    %p44 = scmp.eq.s32.totalorder 0, 0
    // Predicated region
    $region22: #{tpu_custom_call.1} parent=1 // pred_check
      %p45 = pneg %p44
    $region23: #{tpu_custom_call.1} parent=1 // pred_check_branch
      %47 = sbr.rel (%p45) target = $region25
    $region24: #{tpu_custom_call.1} parent=1 // pred_region
      %vm48 = vcmask 7168
      %49 = vst.msk [vmem:[#allocation2] sm:$0xff] %vm48, -inf
      %50 = vst.msk [vmem:[#allocation2 + $0x8] sm:$0xff] %vm48, -inf
      %51 = vst.msk [vmem:[#allocation3] sm:$0xff] %vm48, 0.0
      %52 = vst.msk [vmem:[#allocation3 + $0x8] sm:$0xff] %vm48, 0.0
    $region25: #{tpu_custom_call.1} parent=1 // pred_fallthru
      _
    %v53 = vld [vmem:[#allocation4] sm:$0xf]
    %v54 = vld [vmem:[#allocation4 + $0x4] sm:$0xf]
    %v55 = vld [vmem:[#allocation7] sm:$0xf]
    %v56 = vld [vmem:[#allocation7 + $0x4] sm:$0xf]
    %v57 = vld [vmem:[#allocation7 + $0x8] sm:$0xf]
    %v58 = vld [vmem:[#allocation7 + $0xc] sm:$0xf]
    %v59 = vld [vmem:[%s2] sm:$0x1]
    %v61 = vlaneseq
    %v62 = vshrl.u32 %v61, 7
    %v63 = vsub.s32 0, %v62
    %v64 = vrot.slane %v59, %v63
    %v68 = vunpack.c.l.b16 %v53
    %v69 = vunpack.c.l.b16 %v54
    %v70 = vpack.c.b16 %v69, %v68
    %v75 = vunpack.c.l.b16 %v55
    %v76 = vunpack.c.l.b16 %v56
    %v77 = vunpack.c.l.b16 %v57
    %v78 = vunpack.c.l.b16 %v58
    %v79 = vpack.c.b16 %v76, %v75
    %v80 = vpack.c.b16 %v78, %v77
    %vm83 = vcmask 261120
    %v85 = vsel %vm83, %v70, 0
    %87 = vmatprep.subr.bf16.mxu0 0
    %88 = vmatpush1.bf16.msra.mxu0 0
    %89 = vmatprep.subr.bf16.mxu0 0
    %90 = vmatpush1.bf16.msra.mxu0 0
    %91 = vmatprep.subr.bf16.mxu0 0
    %92 = vmatpush1.bf16.msra.mxu0 0
    %93 = vmatprep.subr.bf16.mxu0 0
    %94 = vmatpush1.bf16.msra.mxu0 0
    %95 = vmatprep.subr.bf16.mxu0 0
    %96 = vmatpush1.bf16.msra.mxu0 0
    %97 = vmatprep.subr.bf16.mxu0 0
    %98 = vmatpush1.bf16.msra.mxu0 0
    %99 = vmatprep.subr.bf16.mxu0 0
    %100 = vmatpush1.bf16.msra.mxu0 %v80
    %101 = vmatprep.subr.bf16.mxu0 0
    %102 = vmatpush1.bf16.msra.mxu0 %v79
    %103 = vmatprep.subr.bf16.mxu0 0
    %104 = vmatpush2.bf16.msra.mxu0 0
    %105 = vmatprep.subr.bf16.mxu0 0
    %106 = vmatpush2.bf16.msra.mxu0 0
    %107 = vmatprep.subr.bf16.mxu0 0
    %108 = vmatpush2.bf16.msra.mxu0 0
    %109 = vmatprep.subr.bf16.mxu0 0
    %110 = vmatpush2.bf16.msra.mxu0 0
    %111 = vmatprep.subr.bf16.mxu0 0
    %112 = vmatpush2.bf16.msra.mxu0 0
    %113 = vmatprep.subr.bf16.mxu0 0
    %114 = vmatpush2.bf16.msra.mxu0 0
    %115 = vmatprep.subr.bf16.mxu0 0
    %116 = vmatpush2.bf16.msra.mxu0 0
    %117 = vmatprep.subr.bf16.mxu0 0
    %118 = vmatpush2.bf16.msra.mxu0 0
    %119 = vmatprep.mubr.bf16.mxu0 0
    %120 = vmatmul.mubr.bf16.gmra.mxu0 %v85
    %v121 = vpop.f32.mrf.mxu0
    %v122 = vadd.f32 %v64, %v121
    %v123 = vpop.f32.mrf.mxu0
    %v124 = vpop.f32.mrf.mxu0
    %v125 = vadd.f32 %v64, %v124
    %v126 = vpop.f32.mrf.mxu0
    %127 = vdwg.mxu0
    %v130 = vcombine.high %v122, %v122
    %v132 = vunpack.c.l.s4 1966171168
    %v133 = vunpack.c.0.s8 %v132
    %v134 = vlaneseq
    %v135 = vshrl.u32 %v134, 7
    %v136 = vsub.s32 %v133, %v135
    %v137 = vrot.slane %v122, %v136
    %v139 = vunpack.c.l.s4 1966171168
    %v140 = vunpack.c.0.s8 %v139
    %v141 = vlaneseq
    %v142 = vshrl.u32 %v141, 7
    %v143 = vsub.s32 %v140, %v142
    %v144 = vrot.slane %v130, %v143
    %v145 = vcombine.high %v137, %v137
    %v146 = vcombine.high %v144, %v144
    %v148 = vunpack.c.l.s4 1966171168
    %v149 = vunpack.c.0.s8 %v148
    %v150 = vlaneseq
    %v151 = vshrl.u32 %v150, 7
    %v152 = vsub.s32 %v149, %v151
    %v153 = vrot.slane %v137, %v152
    %v155 = vunpack.c.l.s4 1966171168
    %v156 = vunpack.c.0.s8 %v155
    %v157 = vlaneseq
    %v158 = vshrl.u32 %v157, 7
    %v159 = vsub.s32 %v156, %v158
    %v160 = vrot.slane %v144, %v159
    %v162 = vunpack.c.l.s4 1966171168
    %v163 = vunpack.c.0.s8 %v162
    %v164 = vlaneseq
    %v165 = vshrl.u32 %v164, 7
    %v166 = vsub.s32 %v163, %v165
    %v167 = vrot.slane %v145, %v166
    %v169 = vunpack.c.l.s4 1966171168
    %v170 = vunpack.c.0.s8 %v169
    %v171 = vlaneseq
    %v172 = vshrl.u32 %v171, 7
    %v173 = vsub.s32 %v170, %v172
    %v174 = vrot.slane %v146, %v173
    %v175 = vcombine.high %v153, %v153
    %v176 = vcombine.high %v160, %v160
    %v177 = vcombine.high %v167, %v167
    %v178 = vcombine.high %v174, %v174
    %v179 = vcombine.high %v125, %v125
    %v181 = vunpack.c.l.s4 1966171168
    %v182 = vunpack.c.0.s8 %v181
    %v183 = vlaneseq
    %v184 = vshrl.u32 %v183, 7
    %v185 = vsub.s32 %v182, %v184
    %v186 = vrot.slane %v125, %v185
    %v188 = vunpack.c.l.s4 1966171168
    %v189 = vunpack.c.0.s8 %v188
    %v190 = vlaneseq
    %v191 = vshrl.u32 %v190, 7
    %v192 = vsub.s32 %v189, %v191
    %v193 = vrot.slane %v179, %v192
    %v194 = vcombine.high %v186, %v186
    %v195 = vcombine.high %v193, %v193
    %v197 = vunpack.c.l.s4 1966171168
    %v198 = vunpack.c.0.s8 %v197
    %v199 = vlaneseq
    %v200 = vshrl.u32 %v199, 7
    %v201 = vsub.s32 %v198, %v200
    %v202 = vrot.slane %v186, %v201
    %v204 = vunpack.c.l.s4 1966171168
    %v205 = vunpack.c.0.s8 %v204
    %v206 = vlaneseq
    %v207 = vshrl.u32 %v206, 7
    %v208 = vsub.s32 %v205, %v207
    %v209 = vrot.slane %v193, %v208
    %v211 = vunpack.c.l.s4 1966171168
    %v212 = vunpack.c.0.s8 %v211
    %v213 = vlaneseq
    %v214 = vshrl.u32 %v213, 7
    %v215 = vsub.s32 %v212, %v214
    %v216 = vrot.slane %v194, %v215
    %v218 = vunpack.c.l.s4 1966171168
    %v219 = vunpack.c.0.s8 %v218
    %v220 = vlaneseq
    %v221 = vshrl.u32 %v220, 7
    %v222 = vsub.s32 %v219, %v221
    %v223 = vrot.slane %v195, %v222
    %v224 = vcombine.high %v202, %v202
    %v225 = vcombine.high %v209, %v209
    %v226 = vcombine.high %v216, %v216
    %v227 = vcombine.high %v223, %v223
    %244 = vst [vmem:[#allocation9] sm:$0x1] %v153
    %245 = vst [vmem:[#allocation9 + $0x1] sm:$0x1] %v167
    %246 = vst [vmem:[#allocation9 + $0x2] sm:$0x1] %v175
    %247 = vst [vmem:[#allocation9 + $0x3] sm:$0x1] %v177
    %248 = vst [vmem:[#allocation9 + $0x4] sm:$0x1] %v160
    %249 = vst [vmem:[#allocation9 + $0x5] sm:$0x1] %v174
    %250 = vst [vmem:[#allocation9 + $0x6] sm:$0x1] %v176
    %251 = vst [vmem:[#allocation9 + $0x7] sm:$0x1] %v178
    %252 = vst [vmem:[#allocation9 + $0x8] sm:$0x1] %v202
    %253 = vst [vmem:[#allocation9 + $0x9] sm:$0x1] %v216
    %254 = vst [vmem:[#allocation9 + $0xa] sm:$0x1] %v224
    %255 = vst [vmem:[#allocation9 + $0xb] sm:$0x1] %v226
    %256 = vst [vmem:[#allocation9 + $0xc] sm:$0x1] %v209
    %257 = vst [vmem:[#allocation9 + $0xd] sm:$0x1] %v223
    %258 = vst [vmem:[#allocation9 + $0xe] sm:$0x1] %v225
    %259 = vst [vmem:[#allocation9 + $0xf] sm:$0x1] %v227
    %v260 = vld [vmem:[#allocation2] sm:$0xff]
    %v261 = vld [vmem:[#allocation2 + $0x8] sm:$0xff]
    %262 = vmax.xlane.f32.xlu0 %v122
    %v263 = vpop.xlane.xlu0 %262
    %264 = vmax.xlane.f32.xlu0 %v125
    %v265 = vpop.xlane.xlu0 %264
    %v266 = vmax.f32 %v260, %v263
    %v267 = vmax.f32 %v261, %v265
    %v268 = vld [vmem:[#allocation3] sm:$0xff]
    %v269 = vld [vmem:[#allocation3 + $0x8] sm:$0xff]
    %v270 = vsub.f32 %v260, %v266
    %v271 = vsub.f32 %v261, %v267
    %v272 = vmul.f32 %v270, 1.442695
    %v273 = vpow.pop %v272
    %v274 = vmul.f32 %v271, 1.442695
    %v275 = vpow.pop %v274
    %v276 = vmul.f32 %v268, %v273
    %v277 = vmul.f32 %v269, %v275
    %279 = vset.pattern.permute.xlu0 0
    %280 = vperm.xlu0 %279, %v266
    %v281 = vpop.permute.xlu0 %280
    %284 = vset.pattern.permute.xlu0 0
    %285 = vperm.xlu0 %284, %v267
    %v286 = vpop.permute.xlu0 %285
    %v288 = vsub.f32 %v122, %v281
    %v289 = vsub.f32 %v125, %v286
    %v290 = vmul.f32 %v288, 1.442695
    %v291 = vpow.pop %v290
    %v292 = vmul.f32 %v289, 1.442695
    %v293 = vpow.pop %v292
    %294 = vadd.xlane.f32.xlu0 %v291
    %v295 = vpop.xlane.xlu0 %294
    %296 = vadd.xlane.f32.xlu0 %v293
    %v297 = vpop.xlane.xlu0 %296
    %v298 = vadd.f32 %v276, %v295
    %v299 = vadd.f32 %v277, %v297
    %vm300 = vcmask 7168
    %301 = vst.msk [vmem:[#allocation3] sm:$0xff] %vm300, %v298
    %302 = vst.msk [vmem:[#allocation3 + $0x8] sm:$0xff] %vm300, %v299
    %303 = vst.msk [vmem:[#allocation2] sm:$0xff] %vm300, %v266
    %304 = vst.msk [vmem:[#allocation2 + $0x8] sm:$0xff] %vm300, %v267
    // Predicated region
    $region26: #{tpu_custom_call.1} parent=1 // pred_check
      %p305 = pneg %p44
    $region27: #{tpu_custom_call.1} parent=1 // pred_check_branch
      %307 = sbr.rel (%p305) target = $region29
    $region28: #{tpu_custom_call.1} parent=1 // pred_region
      %v308 = vld [vmem:[#allocation2] sm:$0xff]
      %v309 = vld [vmem:[#allocation2 + $0x8] sm:$0xff]
      %v310 = vld [vmem:[#allocation3] sm:$0xff]
      %v311 = vld [vmem:[#allocation3 + $0x8] sm:$0xff]
      %v312 = vlog2.pop %v310
      %v313 = vmul.f32 %v312, 0.6931472
      %v314 = vlog2.pop %v311
      %v315 = vmul.f32 %v314, 0.6931472
      %v316 = vadd.f32 %v308, %v313
      %v317 = vadd.f32 %v309, %v315
      %v318 = vld [vmem:[#allocation9] sm:$0x1]
      %v319 = vld [vmem:[#allocation9 + $0x1] sm:$0x1]
      %v320 = vld [vmem:[#allocation9 + $0x2] sm:$0x1]
      %v321 = vld [vmem:[#allocation9 + $0x3] sm:$0x1]
      %v322 = vld [vmem:[#allocation9 + $0x4] sm:$0x1]
      %v323 = vld [vmem:[#allocation9 + $0x5] sm:$0x1]
      %v324 = vld [vmem:[#allocation9 + $0x6] sm:$0x1]
      %v325 = vld [vmem:[#allocation9 + $0x7] sm:$0x1]
      %v326 = vld [vmem:[#allocation9 + $0x8] sm:$0x1]
      %v327 = vld [vmem:[#allocation9 + $0x9] sm:$0x1]
      %v328 = vld [vmem:[#allocation9 + $0xa] sm:$0x1]
      %v329 = vld [vmem:[#allocation9 + $0xb] sm:$0x1]
      %v330 = vld [vmem:[#allocation9 + $0xc] sm:$0x1]
      %v331 = vld [vmem:[#allocation9 + $0xd] sm:$0x1]
      %v332 = vld [vmem:[#allocation9 + $0xe] sm:$0x1]
      %v333 = vld [vmem:[#allocation9 + $0xf] sm:$0x1]
      %v336 = vcombine.high %v316, %v316
      %v338 = vunpack.c.l.s4 1966171168
      %v339 = vunpack.c.0.s8 %v338
      %v340 = vlaneseq
      %v341 = vshrl.u32 %v340, 7
      %v342 = vsub.s32 %v339, %v341
      %v343 = vrot.slane %v316, %v342
      %v345 = vunpack.c.l.s4 1966171168
      %v346 = vunpack.c.0.s8 %v345
      %v347 = vlaneseq
      %v348 = vshrl.u32 %v347, 7
      %v349 = vsub.s32 %v346, %v348
      %v350 = vrot.slane %v336, %v349
      %v351 = vcombine.high %v343, %v343
      %v352 = vcombine.high %v350, %v350
      %v354 = vunpack.c.l.s4 1966171168
      %v355 = vunpack.c.0.s8 %v354
      %v356 = vlaneseq
      %v357 = vshrl.u32 %v356, 7
      %v358 = vsub.s32 %v355, %v357
      %v359 = vrot.slane %v343, %v358
      %v361 = vunpack.c.l.s4 1966171168
      %v362 = vunpack.c.0.s8 %v361
      %v363 = vlaneseq
      %v364 = vshrl.u32 %v363, 7
      %v365 = vsub.s32 %v362, %v364
      %v366 = vrot.slane %v350, %v365
      %v368 = vunpack.c.l.s4 1966171168
      %v369 = vunpack.c.0.s8 %v368
      %v370 = vlaneseq
      %v371 = vshrl.u32 %v370, 7
      %v372 = vsub.s32 %v369, %v371
      %v373 = vrot.slane %v351, %v372
      %v375 = vunpack.c.l.s4 1966171168
      %v376 = vunpack.c.0.s8 %v375
      %v377 = vlaneseq
      %v378 = vshrl.u32 %v377, 7
      %v379 = vsub.s32 %v376, %v378
      %v380 = vrot.slane %v352, %v379
      %v381 = vcombine.high %v359, %v359
      %v382 = vcombine.high %v366, %v366
      %v383 = vcombine.high %v373, %v373
      %v384 = vcombine.high %v380, %v380
      %v385 = vcombine.high %v317, %v317
      %v387 = vunpack.c.l.s4 1966171168
      %v388 = vunpack.c.0.s8 %v387
      %v389 = vlaneseq
      %v390 = vshrl.u32 %v389, 7
      %v391 = vsub.s32 %v388, %v390
      %v392 = vrot.slane %v317, %v391
      %v394 = vunpack.c.l.s4 1966171168
      %v395 = vunpack.c.0.s8 %v394
      %v396 = vlaneseq
      %v397 = vshrl.u32 %v396, 7
      %v398 = vsub.s32 %v395, %v397
      %v399 = vrot.slane %v385, %v398
      %v400 = vcombine.high %v392, %v392
      %v401 = vcombine.high %v399, %v399
      %v403 = vunpack.c.l.s4 1966171168
      %v404 = vunpack.c.0.s8 %v403
      %v405 = vlaneseq
      %v406 = vshrl.u32 %v405, 7
      %v407 = vsub.s32 %v404, %v406
      %v408 = vrot.slane %v392, %v407
      %v410 = vunpack.c.l.s4 1966171168
      %v411 = vunpack.c.0.s8 %v410
      %v412 = vlaneseq
      %v413 = vshrl.u32 %v412, 7
      %v414 = vsub.s32 %v411, %v413
      %v415 = vrot.slane %v399, %v414
      %v417 = vunpack.c.l.s4 1966171168
      %v418 = vunpack.c.0.s8 %v417
      %v419 = vlaneseq
      %v420 = vshrl.u32 %v419, 7
      %v421 = vsub.s32 %v418, %v420
      %v422 = vrot.slane %v400, %v421
      %v424 = vunpack.c.l.s4 1966171168
      %v425 = vunpack.c.0.s8 %v424
      %v426 = vlaneseq
      %v427 = vshrl.u32 %v426, 7
      %v428 = vsub.s32 %v425, %v427
      %v429 = vrot.slane %v401, %v428
      %v430 = vcombine.high %v408, %v408
      %v431 = vcombine.high %v415, %v415
      %v432 = vcombine.high %v422, %v422
      %v433 = vcombine.high %v429, %v429
      %434 = vset.pattern.permute.xlu0 0
      %435 = vperm.xlu0 %434, %v359
      %v436 = vpop.permute.xlu0 %435
      %v438 = vlaneseq
      %v439 = vshrl.u32 %v438, 7
      %v440 = vsub.s32 0, %v439
      %v441 = vrot.slane %v436, %v440
      %442 = vset.pattern.permute.xlu0 0
      %443 = vperm.xlu0 %442, %v373
      %v444 = vpop.permute.xlu0 %443
      %v446 = vlaneseq
      %v447 = vshrl.u32 %v446, 7
      %v448 = vsub.s32 0, %v447
      %v449 = vrot.slane %v444, %v448
      %450 = vset.pattern.permute.xlu0 0
      %451 = vperm.xlu0 %450, %v381
      %v452 = vpop.permute.xlu0 %451
      %v454 = vlaneseq
      %v455 = vshrl.u32 %v454, 7
      %v456 = vsub.s32 0, %v455
      %v457 = vrot.slane %v452, %v456
      %458 = vset.pattern.permute.xlu0 0
      %459 = vperm.xlu0 %458, %v383
      %v460 = vpop.permute.xlu0 %459
      %v462 = vlaneseq
      %v463 = vshrl.u32 %v462, 7
      %v464 = vsub.s32 0, %v463
      %v465 = vrot.slane %v460, %v464
      %466 = vset.pattern.permute.xlu0 0
      %467 = vperm.xlu0 %466, %v366
      %v468 = vpop.permute.xlu0 %467
      %v470 = vlaneseq
      %v471 = vshrl.u32 %v470, 7
      %v472 = vsub.s32 0, %v471
      %v473 = vrot.slane %v468, %v472
      %474 = vset.pattern.permute.xlu0 0
      %475 = vperm.xlu0 %474, %v380
      %v476 = vpop.permute.xlu0 %475
      %v478 = vlaneseq
      %v479 = vshrl.u32 %v478, 7
      %v480 = vsub.s32 0, %v479
      %v481 = vrot.slane %v476, %v480
      %482 = vset.pattern.permute.xlu0 0
      %483 = vperm.xlu0 %482, %v382
      %v484 = vpop.permute.xlu0 %483
      %v486 = vlaneseq
      %v487 = vshrl.u32 %v486, 7
      %v488 = vsub.s32 0, %v487
      %v489 = vrot.slane %v484, %v488
      %490 = vset.pattern.permute.xlu0 0
      %491 = vperm.xlu0 %490, %v384
      %v492 = vpop.permute.xlu0 %491
      %v494 = vlaneseq
      %v495 = vshrl.u32 %v494, 7
      %v496 = vsub.s32 0, %v495
      %v497 = vrot.slane %v492, %v496
      %498 = vset.pattern.permute.xlu0 0
      %499 = vperm.xlu0 %498, %v408
      %v500 = vpop.permute.xlu0 %499
      %v502 = vlaneseq
      %v503 = vshrl.u32 %v502, 7
      %v504 = vsub.s32 0, %v503
      %v505 = vrot.slane %v500, %v504
      %506 = vset.pattern.permute.xlu0 0
      %507 = vperm.xlu0 %506, %v422
      %v508 = vpop.permute.xlu0 %507
      %v510 = vlaneseq
      %v511 = vshrl.u32 %v510, 7
      %v512 = vsub.s32 0, %v511
      %v513 = vrot.slane %v508, %v512
      %514 = vset.pattern.permute.xlu0 0
      %515 = vperm.xlu0 %514, %v430
      %v516 = vpop.permute.xlu0 %515
      %v518 = vlaneseq
      %v519 = vshrl.u32 %v518, 7
      %v520 = vsub.s32 0, %v519
      %v521 = vrot.slane %v516, %v520
      %522 = vset.pattern.permute.xlu0 0
      %523 = vperm.xlu0 %522, %v432
      %v524 = vpop.permute.xlu0 %523
      %v526 = vlaneseq
      %v527 = vshrl.u32 %v526, 7
      %v528 = vsub.s32 0, %v527
      %v529 = vrot.slane %v524, %v528
      %530 = vset.pattern.permute.xlu0 0
      %531 = vperm.xlu0 %530, %v415
      %v532 = vpop.permute.xlu0 %531
      %v534 = vlaneseq
      %v535 = vshrl.u32 %v534, 7
      %v536 = vsub.s32 0, %v535
      %v537 = vrot.slane %v532, %v536
      %538 = vset.pattern.permute.xlu0 0
      %539 = vperm.xlu0 %538, %v429
      %v540 = vpop.permute.xlu0 %539
      %v542 = vlaneseq
      %v543 = vshrl.u32 %v542, 7
      %v544 = vsub.s32 0, %v543
      %v545 = vrot.slane %v540, %v544
      %546 = vset.pattern.permute.xlu0 0
      %547 = vperm.xlu0 %546, %v431
      %v548 = vpop.permute.xlu0 %547
      %v550 = vlaneseq
      %v551 = vshrl.u32 %v550, 7
      %v552 = vsub.s32 0, %v551
      %v553 = vrot.slane %v548, %v552
      %554 = vset.pattern.permute.xlu0 0
      %555 = vperm.xlu0 %554, %v433
      %v556 = vpop.permute.xlu0 %555
      %v558 = vlaneseq
      %v559 = vshrl.u32 %v558, 7
      %v560 = vsub.s32 0, %v559
      %v561 = vrot.slane %v556, %v560
      %v562 = vsub.f32 %v318, %v441
      %v563 = vsub.f32 %v319, %v449
      %v564 = vsub.f32 %v320, %v457
      %v565 = vsub.f32 %v321, %v465
      %v566 = vsub.f32 %v322, %v473
      %v567 = vsub.f32 %v323, %v481
      %v568 = vsub.f32 %v324, %v489
      %v569 = vsub.f32 %v325, %v497
      %v570 = vsub.f32 %v326, %v505
      %v571 = vsub.f32 %v327, %v513
      %v572 = vsub.f32 %v328, %v521
      %v573 = vsub.f32 %v329, %v529
      %v574 = vsub.f32 %v330, %v537
      %v575 = vsub.f32 %v331, %v545
      %v576 = vsub.f32 %v332, %v553
      %v577 = vsub.f32 %v333, %v561
      %578 = vst [vmem:[#allocation9] sm:$0x1] %v562
      %579 = vst [vmem:[#allocation9 + $0x1] sm:$0x1] %v563
      %580 = vst [vmem:[#allocation9 + $0x2] sm:$0x1] %v564
      %581 = vst [vmem:[#allocation9 + $0x3] sm:$0x1] %v565
      %582 = vst [vmem:[#allocation9 + $0x4] sm:$0x1] %v566
      %583 = vst [vmem:[#allocation9 + $0x5] sm:$0x1] %v567
      %584 = vst [vmem:[#allocation9 + $0x6] sm:$0x1] %v568
      %585 = vst [vmem:[#allocation9 + $0x7] sm:$0x1] %v569
      %586 = vst [vmem:[#allocation9 + $0x8] sm:$0x1] %v570
      %587 = vst [vmem:[#allocation9 + $0x9] sm:$0x1] %v571
      %588 = vst [vmem:[#allocation9 + $0xa] sm:$0x1] %v572
      %589 = vst [vmem:[#allocation9 + $0xb] sm:$0x1] %v573
      %590 = vst [vmem:[#allocation9 + $0xc] sm:$0x1] %v574
      %591 = vst [vmem:[#allocation9 + $0xd] sm:$0x1] %v575
      %592 = vst [vmem:[#allocation9 + $0xe] sm:$0x1] %v576
      %593 = vst [vmem:[#allocation9 + $0xf] sm:$0x1] %v577
    $region29: #{tpu_custom_call.1} parent=1 // pred_fallthru
      _
    // Predicated region
    $region30: #{tpu_custom_call.1} parent=1 // pred_check
      _
    $region31: #{tpu_custom_call.1} parent=1 // pred_check_branch
      %595 = sbr.rel (0) target = $region33
    $region32: #{tpu_custom_call.1} parent=1 // pred_region
      %s597 = ssub.s32 256, 256
      %598 = vsyncadd [#allocation6], %s597
      %s599 = sshll.u32 [#allocation9], 4
      %s600 = int_to_ptr.vmem [resolvable:$true] %s599
      %605 = dma.vmem_to_hbm [thread:$0]  %s600, 256, %s3, [#allocation6], 16, 16, 1
    $region33: #{tpu_custom_call.1} parent=1 // pred_fallthru
      _
    // Predicated region
    $region34: #{tpu_custom_call.1} parent=1 // pred_check
      _
    $region35: #{tpu_custom_call.1} parent=1 // pred_check_branch
      %607 = sbr.rel (0) target = $region37
    $region36: #{tpu_custom_call.1} parent=1 // pred_region
      %608 = dma.done [#allocation6], 256
    $region37: #{tpu_custom_call.1} parent=1 // pred_fallthru
      _
    %609 = vsyncpa [#allocation5], 1
    %610 = vsyncpa [#allocation8], 1
    %611 = vsyncpa [#allocation6], 1

</llo_original>
